<compile_context>
chip_gen: v5e
topology: v5e:2x2
jax: 0.10.0
libtpu: 0.0.40
codegen_flags: <defaults>
</compile_context>

<pallas_src>
import functools

import jax
import jax.numpy as jnp
from jax.experimental import pallas as pl
from jax.experimental.pallas import tpu as pltpu


def _softplus(x):
    # matches torch.nn.functional.softplus (beta=1), numerically stable
    return jnp.logaddexp(x, 0.0)


def _pick_batch_tile(B, col_bytes, vmem_budget=24 << 20):
    """Largest lane-dense (multiple-of-128) batch tile under a VMEM budget.

    Once the batch needs more than one tile we keep >= 2 grid steps so the
    "parallel" batch axis can shard across TensorCores (v7x has 2 TCs);
    no effect on single-TC chips (v5e / v6e).
    """
    bt = 128
    while bt < 2048:
        nxt = bt * 2
        if nxt * col_bytes > vmem_budget:
            break
        if pl.cdiv(B, nxt) < 2:
            break
        bt = nxt
    return bt


def net_kernel(N, n_hidden, x_ref, *refs):
    """One batch tile of the forward pass; batch lives on the lane axis.

    Shapes (bt = batch tile, NN = N*N):
      x_ref : (2*NN, bt)       raw [p_flat ; q_flat] (ReLU + masks derived here)
      W_t   : (out, in)        transposed hidden weights,  b : (out, 1)
      Wh_t  : (2*NN+2*N, lat)  fused head, rows = [r_main; c_main; r_pad; c_pad]
      SRt   : (2*N, 2*NN)      blockdiag(S^T, R^T): per-column / per-row sums
      SR    : (2*NN, 2*N)      blockdiag(S, R): broadcast the sums back
      out   : (NN, bt)         min(row, col), flat i*N+j
    """
    NN = N * N
    out_ref = refs[-1]
    Wh_t = refs[2 * n_hidden][...]
    bh = refs[2 * n_hidden + 1][...]
    SRt = refs[2 * n_hidden + 2][...]
    SR = refs[2 * n_hidden + 3][...]

    x_raw = x_ref[...]                                   # (2NN, bt)
    mask = (x_raw > 0.0).astype(jnp.float32)             # [mask_p ; mask_q]
    x = jnp.maximum(x_raw, 0.0)                          # relu(p), relu(q)

    # Dense blocks: Linear + ReLU, all (features, bt) lane-dense tiles.
    for li in range(n_hidden):
        W_t = refs[2 * li][...]
        b = refs[2 * li + 1][...]
        x = jnp.maximum(
            jnp.dot(W_t, x, preferred_element_type=jnp.float32) + b, 0.0)

    # Fused output head: rows = [r_main | c_main | r_pad | c_pad].
    h = jnp.dot(Wh_t, x, preferred_element_type=jnp.float32) + bh     # (2NN+2N, bt)
    h_sp = _softplus(h)

    num = h_sp[:2 * NN, :] * mask        # [softplus(r)*mask_p ; softplus(c)*mask_q]
    pad = h_sp[2 * NN:, :]               # padded row / col (their mask is 1)

    # L1-normalization denominators: two merged block-diagonal matmuls.
    den_small = jnp.dot(SRt, num, preferred_element_type=jnp.float32) + pad  # (2N, bt)
    den = jnp.dot(SR, den_small, preferred_element_type=jnp.float32)         # (2NN, bt)

    nrm = num * pl.reciprocal(jnp.maximum(den, 1e-8), approx=True)
    out_ref[...] = jnp.minimum(nrm[:NN, :], nrm[NN:, :])


@functools.partial(jax.jit, static_argnames=("num_agents", "n_hidden"))
def net_forward(p, q, params, num_agents, n_hidden):
    B = p.shape[0]
    N = num_agents
    NN = N * N
    head_w = 2 * NN + 2 * N

    hidden = params[: 2 * n_hidden]
    Wr, br, Wc, bc = params[2 * n_hidden:]
    latent = Wr.shape[0]

    # ---- wrapper-side layout glue (everything transposed: batch on lanes) ----
    # x = stack([relu(p), relu(q)], 1).view(B, 2*NN), transposed to (2*NN, B).
    x_t = jnp.concatenate([p.reshape(B, NN).T, q.reshape(B, NN).T], axis=0)

    # Hidden layers: W -> (out, in), bias -> (out, 1).
    hidden_t = []
    for li in range(n_hidden):
        hidden_t.append(hidden[2 * li].T)
        hidden_t.append(hidden[2 * li + 1].reshape(-1, 1))

    # Fused head, rows = [r_main (i*N+j) | c_main (i*N+j) | r_pad (N) | c_pad (N)].
    Wc3 = Wc.reshape(latent, N, N + 1)
    bc3 = bc.reshape(N, N + 1)
    br1 = br.reshape(-1)
    Wh_t = jnp.concatenate(
        [Wr[:, :NN], Wc3[:, :, :N].reshape(latent, NN), Wr[:, NN:], Wc3[:, :, N]],
        axis=1).T                                                     # (head_w, latent)
    bh = jnp.concatenate(
        [br1[:NN], bc3[:, :N].reshape(NN), br1[NN:], bc3[:, N]],
        axis=0).reshape(head_w, 1)

    # Block-diagonal 0/1 reduction constants:
    #   S[i*N+j, j'] = (j == j')  -> sum over rows i, per column j
    #   R[i*N+j, i'] = (i == i')  -> sum over cols j, per row i
    k = jnp.arange(NN)
    j = jnp.arange(N)
    S = (k[:, None] % N == j[None, :]).astype(jnp.float32)    # (NN, N)
    R = (k[:, None] // N == j[None, :]).astype(jnp.float32)   # (NN, N)
    Z = jnp.zeros((NN, N), jnp.float32)
    SR = jnp.concatenate(
        [jnp.concatenate([S, Z], axis=1), jnp.concatenate([Z, R], axis=1)],
        axis=0)                                                # (2NN, 2N)
    SRt = SR.T                                                 # (2N, 2NN)

    resident = hidden_t + [Wh_t, bh, SRt, SR]

    # ---- VMEM-aware lane-dense batch tiling ----
    hidden_dims = [hidden[2 * li].shape[1] for li in range(n_hidden)]
    # per-batch-column f32 footprint: double-buffered in/out blocks + activations
    col_floats = 2 * (2 * NN) + 2 * NN + sum(hidden_dims) + head_w + 4 * (2 * NN)
    bt = _pick_batch_tile(B, 4 * col_floats)
    grid = (pl.cdiv(B, bt),)
    B_pad = grid[0] * bt
    if B_pad != B:
        # zero columns are benign: masks become 0, denominators are eps-clamped
        x_t = jnp.pad(x_t, ((0, 0), (0, B_pad - B)))

    in_specs = [pl.BlockSpec((2 * NN, bt), lambda i: (0, i))]
    # Weights / constants: full-array blocks, same block every grid step
    # (stay VMEM-resident, no per-step re-DMA).
    in_specs += [pl.BlockSpec(a.shape, lambda i: (0, 0)) for a in resident]

    kernel = functools.partial(net_kernel, N, n_hidden)
    out_t = pl.pallas_call(
        kernel,
        out_shape=jax.ShapeDtypeStruct((NN, B_pad), jnp.float32),
        grid=grid,
        in_specs=in_specs,
        out_specs=pl.BlockSpec((NN, bt), lambda i: (0, i)),
        compiler_params=pltpu.CompilerParams(
            dimension_semantics=("parallel",),
            vmem_limit_bytes=32 * 1024 * 1024),
    )(x_t, *resident)

    # layout glue: (NN, B_pad) -> (B, N, N)
    return out_t[:, :B].T.reshape(B, N, N)


def init_params(key, net_arch, num_agents):
    """Deterministic params mimicking nn.Linear default init (U(-1/sqrt(fan_in), ...))."""
    N = num_agents
    dims = [2 * N * N] + list(net_arch)
    params = []
    for i in range(len(net_arch)):
        key, k1, k2 = jax.random.split(key, 3)
        bound = 1.0 / float(dims[i]) ** 0.5
        params.append(jax.random.uniform(k1, (dims[i], dims[i + 1]), jnp.float32, -bound, bound))
        params.append(jax.random.uniform(k2, (1, dims[i + 1]), jnp.float32, -bound, bound))
    latent = dims[-1]
    key, k1, k2, k3, k4 = jax.random.split(key, 5)
    bound = 1.0 / float(latent) ** 0.5
    params.append(jax.random.uniform(k1, (latent, (N + 1) * N), jnp.float32, -bound, bound))
    params.append(jax.random.uniform(k2, (1, (N + 1) * N), jnp.float32, -bound, bound))
    params.append(jax.random.uniform(k3, (latent, N * (N + 1)), jnp.float32, -bound, bound))
    params.append(jax.random.uniform(k4, (1, N * (N + 1)), jnp.float32, -bound, bound))
    return params


def reference_forward(p, q, params, num_agents, n_hidden):
    """Pure-JAX transcription of the PyTorch forward (for verification)."""
    N = num_agents
    B = p.shape[0]
    pr = jnp.maximum(p, 0.0)
    qr = jnp.maximum(q, 0.0)
    mask_p = jnp.pad((pr > 0).astype(jnp.float32), ((0, 0), (0, 1), (0, 0)), constant_values=1.0)
    mask_q = jnp.pad((qr > 0).astype(jnp.float32), ((0, 0), (0, 0), (0, 1)), constant_values=1.0)
    x = jnp.stack([pr, qr], axis=1).reshape(B, 2 * N * N)
    for li in range(n_hidden):
        x = jnp.maximum(x @ params[2 * li] + params[2 * li + 1], 0.0)
    r = (x @ params[2 * n_hidden] + params[2 * n_hidden + 1]).reshape(B, N + 1, N)
    c = (x @ params[2 * n_hidden + 2] + params[2 * n_hidden + 3]).reshape(B, N, N + 1)
    row = jax.nn.softplus(r) * mask_p
    col = jax.nn.softplus(c) * mask_q
    row = row / jnp.maximum(jnp.sum(jnp.abs(row), axis=1, keepdims=True), 1e-8)
    col = col / jnp.maximum(jnp.sum(jnp.abs(col), axis=2, keepdims=True), 1e-8)
    return jnp.minimum(row[:, :-1, :], col[:, :, :-1])


if __name__ == "__main__":
    num_agents = 4          # N
    net_arch = [32, 32]     # two DenseBlocks with ReLU
    batch = 2

    key = jax.random.PRNGKey(0)
    kp, kq, kw = jax.random.split(key, 3)
    p = jax.random.normal(kp, (batch, num_agents, num_agents), jnp.float32)
    q = jax.random.normal(kq, (batch, num_agents, num_agents), jnp.float32)
    params = init_params(kw, net_arch, num_agents)

    out = net_forward(p, q, params, num_agents=num_agents, n_hidden=len(net_arch))
    out = jax.block_until_ready(out)

    ref = reference_forward(p, q, params, num_agents, len(net_arch))
    assert out.shape == (batch, num_agents, num_agents)
    # tolerance relaxed from 1e-5 because the kernel uses the EUP approximate
    # reciprocal (pl.reciprocal(approx=True)) for the L1 normalization
    assert jnp.allclose(out, ref, atol=5e-3, rtol=5e-3), (out, ref)
    print("KERNEL_OK")
</pallas_src>

<mosaic_0001>
module attributes {stable_mosaic.version = 11 : i64} {
  func.func @net_kernel(%arg0: i32, %arg1: memref<32x128xf32, #tpu.memory_space<vmem>>, %arg2: memref<32x32xf32, #tpu.memory_space<vmem>>, %arg3: memref<32x1xf32, #tpu.memory_space<vmem>>, %arg4: memref<32x32xf32, #tpu.memory_space<vmem>>, %arg5: memref<32x1xf32, #tpu.memory_space<vmem>>, %arg6: memref<40x32xf32, #tpu.memory_space<vmem>>, %arg7: memref<40x1xf32, #tpu.memory_space<vmem>>, %arg8: memref<8x32xf32, #tpu.memory_space<vmem>>, %arg9: memref<32x8xf32, #tpu.memory_space<vmem>>, %arg10: memref<16x128xf32, #tpu.memory_space<vmem>>) attributes {dimension_semantics = [#tpu.dimension_semantics<parallel>], iteration_bounds = array<i64: 1>, scalar_prefetch = 0 : i64, scratch_operands = 0 : i64, tpu.core_type = #tpu.core_type<tc>, window_params = [{transform_indices = @transform_0, window_bounds = array<i64: 32, 128>}, {pipeline_mode = #tpu.pipeline_mode<synchronous>, transform_indices = @transform_1, window_bounds = array<i64: 32, 32>}, {pipeline_mode = #tpu.pipeline_mode<synchronous>, transform_indices = @transform_2, window_bounds = array<i64: 32, 1>}, {pipeline_mode = #tpu.pipeline_mode<synchronous>, transform_indices = @transform_3, window_bounds = array<i64: 32, 32>}, {pipeline_mode = #tpu.pipeline_mode<synchronous>, transform_indices = @transform_4, window_bounds = array<i64: 32, 1>}, {pipeline_mode = #tpu.pipeline_mode<synchronous>, transform_indices = @transform_5, window_bounds = array<i64: 40, 32>}, {pipeline_mode = #tpu.pipeline_mode<synchronous>, transform_indices = @transform_6, window_bounds = array<i64: 40, 1>}, {pipeline_mode = #tpu.pipeline_mode<synchronous>, transform_indices = @transform_7, window_bounds = array<i64: 8, 32>}, {pipeline_mode = #tpu.pipeline_mode<synchronous>, transform_indices = @transform_8, window_bounds = array<i64: 32, 8>}, {transform_indices = @transform_9, window_bounds = array<i64: 16, 128>}]} {
    %c0 = arith.constant 0 : index
    %c0_0 = arith.constant 0 : index
    %0 = vector.load %arg6[%c0, %c0_0] : memref<40x32xf32, #tpu.memory_space<vmem>>, vector<40x32xf32>
    %c0_1 = arith.constant 0 : index
    %c0_2 = arith.constant 0 : index
    %1 = vector.load %arg7[%c0_1, %c0_2] : memref<40x1xf32, #tpu.memory_space<vmem>>, vector<40x1xf32>
    %c0_3 = arith.constant 0 : index
    %c0_4 = arith.constant 0 : index
    %2 = vector.load %arg8[%c0_3, %c0_4] : memref<8x32xf32, #tpu.memory_space<vmem>>, vector<8x32xf32>
    %c0_5 = arith.constant 0 : index
    %c0_6 = arith.constant 0 : index
    %3 = vector.load %arg9[%c0_5, %c0_6] : memref<32x8xf32, #tpu.memory_space<vmem>>, vector<32x8xf32>
    %c0_7 = arith.constant 0 : index
    %c0_8 = arith.constant 0 : index
    %4 = vector.load %arg1[%c0_7, %c0_8] : memref<32x128xf32, #tpu.memory_space<vmem>>, vector<32x128xf32>
    %cst = arith.constant 0.000000e+00 : f32
    %5 = vector.broadcast %cst : f32 to vector<32x128xf32>
    %6 = arith.cmpf ogt, %4, %5 : vector<32x128xf32>
    %7 = arith.extui %6 : vector<32x128xi1> to vector<32x128xi32>
    %8 = arith.sitofp %7 : vector<32x128xi32> to vector<32x128xf32>
    %cst_9 = arith.constant 0.000000e+00 : f32
    %9 = vector.broadcast %cst_9 : f32 to vector<32x128xf32>
    %10 = arith.maximumf %4, %9 : vector<32x128xf32>
    %c0_10 = arith.constant 0 : index
    %c0_11 = arith.constant 0 : index
    %11 = vector.load %arg2[%c0_10, %c0_11] : memref<32x32xf32, #tpu.memory_space<vmem>>, vector<32x32xf32>
    %c0_12 = arith.constant 0 : index
    %c0_13 = arith.constant 0 : index
    %12 = vector.load %arg3[%c0_12, %c0_13] : memref<32x1xf32, #tpu.memory_space<vmem>>, vector<32x1xf32>
    %cst_14 = arith.constant dense<0.000000e+00> : vector<32x128xf32>
    %13 = tpu.matmul %11, %10, %cst_14 {dimension_numbers = #tpu.dot_dimension_numbers<[1], [0], [0], [1], [0, 0, 1, 1], [], []>} : vector<32x32xf32>, vector<32x128xf32>, vector<32x128xf32> -> vector<32x128xf32>
    %14 = vector.broadcast %12 : vector<32x1xf32> to vector<32x128xf32>
    %15 = arith.addf %13, %14 : vector<32x128xf32>
    %cst_15 = arith.constant 0.000000e+00 : f32
    %16 = vector.broadcast %cst_15 : f32 to vector<32x128xf32>
    %17 = arith.maximumf %15, %16 : vector<32x128xf32>
    %c0_16 = arith.constant 0 : index
    %c0_17 = arith.constant 0 : index
    %18 = vector.load %arg4[%c0_16, %c0_17] : memref<32x32xf32, #tpu.memory_space<vmem>>, vector<32x32xf32>
    %c0_18 = arith.constant 0 : index
    %c0_19 = arith.constant 0 : index
    %19 = vector.load %arg5[%c0_18, %c0_19] : memref<32x1xf32, #tpu.memory_space<vmem>>, vector<32x1xf32>
    %cst_20 = arith.constant dense<0.000000e+00> : vector<32x128xf32>
    %20 = tpu.matmul %18, %17, %cst_20 {dimension_numbers = #tpu.dot_dimension_numbers<[1], [0], [0], [1], [0, 0, 1, 1], [], []>} : vector<32x32xf32>, vector<32x128xf32>, vector<32x128xf32> -> vector<32x128xf32>
    %21 = vector.broadcast %19 : vector<32x1xf32> to vector<32x128xf32>
    %22 = arith.addf %20, %21 : vector<32x128xf32>
    %cst_21 = arith.constant 0.000000e+00 : f32
    %23 = vector.broadcast %cst_21 : f32 to vector<32x128xf32>
    %24 = arith.maximumf %22, %23 : vector<32x128xf32>
    %cst_22 = arith.constant dense<0.000000e+00> : vector<40x128xf32>
    %25 = tpu.matmul %0, %24, %cst_22 {dimension_numbers = #tpu.dot_dimension_numbers<[1], [0], [0], [1], [0, 0, 1, 1], [], []>} : vector<40x32xf32>, vector<32x128xf32>, vector<40x128xf32> -> vector<40x128xf32>
    %26 = vector.broadcast %1 : vector<40x1xf32> to vector<40x128xf32>
    %27 = arith.addf %25, %26 : vector<40x128xf32>
    %cst_23 = arith.constant 0.000000e+00 : f32
    %28 = vector.broadcast %cst_23 : f32 to vector<40x128xf32>
    %29 = arith.maximumf %27, %28 : vector<40x128xf32>
    %30 = vector.broadcast %cst_23 : f32 to vector<40x128xf32>
    %31 = arith.subf %27, %30 : vector<40x128xf32>
    %32 = arith.cmpf one, %31, %31 : vector<40x128xf32>
    %33 = vector.broadcast %cst_23 : f32 to vector<40x128xf32>
    %34 = arith.addf %27, %33 : vector<40x128xf32>
    %35 = math.absf %31 : vector<40x128xf32>
    %cst_24 = arith.constant 0.000000e+00 : f32
    %36 = vector.broadcast %cst_24 : f32 to vector<40x128xf32>
    %37 = arith.subf %36, %35 : vector<40x128xf32>
    %38 = math.exp %37 : vector<40x128xf32>
    %39 = math.log1p %38 : vector<40x128xf32>
    %40 = arith.addf %29, %39 : vector<40x128xf32>
    %41 = arith.select %32, %34, %40 : vector<40x128xi1>, vector<40x128xf32>
    %42 = vector.extract_strided_slice %41 {offsets = [0, 0], sizes = [32, 128], strides = [1, 1]} : vector<40x128xf32> to vector<32x128xf32>
    %43 = arith.mulf %42, %8 : vector<32x128xf32>
    %44 = vector.extract_strided_slice %41 {offsets = [32, 0], sizes = [8, 128], strides = [1, 1]} : vector<40x128xf32> to vector<8x128xf32>
    %cst_25 = arith.constant dense<0.000000e+00> : vector<8x128xf32>
    %45 = tpu.matmul %2, %43, %cst_25 {dimension_numbers = #tpu.dot_dimension_numbers<[1], [0], [0], [1], [0, 0, 1, 1], [], []>} : vector<8x32xf32>, vector<32x128xf32>, vector<8x128xf32> -> vector<8x128xf32>
    %46 = arith.addf %45, %44 : vector<8x128xf32>
    %cst_26 = arith.constant dense<0.000000e+00> : vector<32x128xf32>
    %47 = tpu.matmul %3, %46, %cst_26 {dimension_numbers = #tpu.dot_dimension_numbers<[1], [0], [0], [1], [0, 0, 1, 1], [], []>} : vector<32x8xf32>, vector<8x128xf32>, vector<32x128xf32> -> vector<32x128xf32>
    %cst_27 = arith.constant 9.99999993E-9 : f32
    %48 = vector.broadcast %cst_27 : f32 to vector<32x128xf32>
    %49 = arith.maximumf %47, %48 : vector<32x128xf32>
    %50 = tpu.reciprocal %49 {approx = true} : vector<32x128xf32> -> vector<32x128xf32>
    %51 = arith.mulf %43, %50 : vector<32x128xf32>
    %52 = vector.extract_strided_slice %51 {offsets = [0, 0], sizes = [16, 128], strides = [1, 1]} : vector<32x128xf32> to vector<16x128xf32>
    %53 = vector.extract_strided_slice %51 {offsets = [16, 0], sizes = [16, 128], strides = [1, 1]} : vector<32x128xf32> to vector<16x128xf32>
    %54 = arith.minimumf %52, %53 : vector<16x128xf32>
    %c0_28 = arith.constant 0 : index
    %c0_29 = arith.constant 0 : index
    %55 = vector.load %arg10[%c0_28, %c0_29] : memref<16x128xf32, #tpu.memory_space<vmem>>, vector<16x128xf32>
    tpu.vector_store %arg10[%c0_28, %c0_29], %54 {strides = array<i32>} : memref<16x128xf32, #tpu.memory_space<vmem>>, vector<16x128xf32>,
    return
  }
  func.func @transform_0(%arg0: i32) -> (i32, i32) {
    %c0_i32 = arith.constant 0 : i32
    %c0_i32_0 = arith.constant 0 : i32
    return %c0_i32, %arg0 : i32, i32
  }
  func.func @transform_1(%arg0: i32) -> (i32, i32) {
    %c0_i32 = arith.constant 0 : i32
    %c0_i32_0 = arith.constant 0 : i32
    %c0_i32_1 = arith.constant 0 : i32
    return %c0_i32, %c0_i32_0 : i32, i32
  }
  func.func @transform_2(%arg0: i32) -> (i32, i32) {
    %c0_i32 = arith.constant 0 : i32
    %c0_i32_0 = arith.constant 0 : i32
    %c0_i32_1 = arith.constant 0 : i32
    return %c0_i32, %c0_i32_0 : i32, i32
  }
  func.func @transform_3(%arg0: i32) -> (i32, i32) {
    %c0_i32 = arith.constant 0 : i32
    %c0_i32_0 = arith.constant 0 : i32
    %c0_i32_1 = arith.constant 0 : i32
    return %c0_i32, %c0_i32_0 : i32, i32
  }
  func.func @transform_4(%arg0: i32) -> (i32, i32) {
    %c0_i32 = arith.constant 0 : i32
    %c0_i32_0 = arith.constant 0 : i32
    %c0_i32_1 = arith.constant 0 : i32
    return %c0_i32, %c0_i32_0 : i32, i32
  }
  func.func @transform_5(%arg0: i32) -> (i32, i32) {
    %c0_i32 = arith.constant 0 : i32
    %c0_i32_0 = arith.constant 0 : i32
    %c0_i32_1 = arith.constant 0 : i32
    return %c0_i32, %c0_i32_0 : i32, i32
  }
  func.func @transform_6(%arg0: i32) -> (i32, i32) {
    %c0_i32 = arith.constant 0 : i32
    %c0_i32_0 = arith.constant 0 : i32
    %c0_i32_1 = arith.constant 0 : i32
    return %c0_i32, %c0_i32_0 : i32, i32
  }
  func.func @transform_7(%arg0: i32) -> (i32, i32) {
    %c0_i32 = arith.constant 0 : i32
    %c0_i32_0 = arith.constant 0 : i32
    %c0_i32_1 = arith.constant 0 : i32
    return %c0_i32, %c0_i32_0 : i32, i32
  }
  func.func @transform_8(%arg0: i32) -> (i32, i32) {
    %c0_i32 = arith.constant 0 : i32
    %c0_i32_0 = arith.constant 0 : i32
    %c0_i32_1 = arith.constant 0 : i32
    return %c0_i32, %c0_i32_0 : i32, i32
  }
  func.func @transform_9(%arg0: i32) -> (i32, i32) {
    %c0_i32 = arith.constant 0 : i32
    %c0_i32_0 = arith.constant 0 : i32
    return %c0_i32, %arg0 : i32, i32
  }
}

</mosaic_0001>

<llo_original>
// kernel: net_forward.1
$region0: #{net_forward.1}
  #allocation0 [shape = 'u32[]', space=smem, size = 0x4, offset = 0x4, fixed_abs, tag = 'smem constant byte address 0x4 - core index']
  #allocation1 [shape = 'u32[72,128]{1,0:T(1,128)}', space=vmem, size = 0x9000, scoped, tag = 'internal scratch']
  %s0 = inlined_call_operand.vmem [shape: f32[32,128], index: 0, kind: input, shape index: {}]
  %s1 = inlined_call_operand.vmem [shape: f32[32,32], index: 1, kind: input, shape index: {}]
  %s2 = inlined_call_operand.vmem [shape: f32[32,1], index: 2, kind: input, shape index: {}]
  %s3 = inlined_call_operand.vmem [shape: f32[32,32], index: 3, kind: input, shape index: {}]
  %s4 = inlined_call_operand.vmem [shape: f32[32,1], index: 4, kind: input, shape index: {}]
  %s5 = inlined_call_operand.vmem [shape: f32[40,32], index: 5, kind: input, shape index: {}]
  %s6 = inlined_call_operand.vmem [shape: f32[40,1], index: 6, kind: input, shape index: {}]
  %s7 = inlined_call_operand.vmem [shape: f32[8,32], index: 7, kind: input, shape index: {}]
  %s8 = inlined_call_operand.vmem [shape: f32[32,8], index: 8, kind: input, shape index: {}]
  %s9 = inlined_call_operand.vmem [shape: f32[16,128], index: 9, kind: output, shape index: {}]
  %s10 = sld [smem:[#allocation0]]
  $region46: #{net_forward.1} parent=0
    _
  %s12 = ssub.s32 1, %s10
  %s13 = scalar_select 0, %s12, %s10
  // Predicated region
  $region2: #{net_forward.1} parent=0 // pred_check
    _
  $region3: #{net_forward.1} parent=0 // pred_check_branch
    %15 = sbr.rel (0) target = $region5
  $region4: #{net_forward.1} parent=0 // pred_region
    _
  $region5: #{net_forward.1} parent=0 // pred_fallthru
    _
  // Predicated region
  $region6: #{net_forward.1} parent=0 // pred_check
    _
  $region7: #{net_forward.1} parent=0 // pred_check_branch
    %17 = sbr.rel (0) target = $region9
  $region8: #{net_forward.1} parent=0 // pred_region
    _
  $region9: #{net_forward.1} parent=0 // pred_fallthru
    _
  // Predicated region
  $region10: #{net_forward.1} parent=0 // pred_check
    _
  $region11: #{net_forward.1} parent=0 // pred_check_branch
    %19 = sbr.rel (0) target = $region13
  $region12: #{net_forward.1} parent=0 // pred_region
    _
  $region13: #{net_forward.1} parent=0 // pred_fallthru
    _
  // Predicated region
  $region14: #{net_forward.1} parent=0 // pred_check
    _
  $region15: #{net_forward.1} parent=0 // pred_check_branch
    %21 = sbr.rel (0) target = $region17
  $region16: #{net_forward.1} parent=0 // pred_region
    _
  $region17: #{net_forward.1} parent=0 // pred_fallthru
    _
  // Predicated region
  $region18: #{net_forward.1} parent=0 // pred_check
    _
  $region19: #{net_forward.1} parent=0 // pred_check_branch
    %23 = sbr.rel (0) target = $region21
  $region20: #{net_forward.1} parent=0 // pred_region
    _
  $region21: #{net_forward.1} parent=0 // pred_fallthru
    _
  // Predicated region
  $region22: #{net_forward.1} parent=0 // pred_check
    _
  $region23: #{net_forward.1} parent=0 // pred_check_branch
    %25 = sbr.rel (0) target = $region25
  $region24: #{net_forward.1} parent=0 // pred_region
    _
  $region25: #{net_forward.1} parent=0 // pred_fallthru
    _
  // Predicated region
  $region26: #{net_forward.1} parent=0 // pred_check
    _
  $region27: #{net_forward.1} parent=0 // pred_check_branch
    %27 = sbr.rel (0) target = $region29
  $region28: #{net_forward.1} parent=0 // pred_region
    _
  $region29: #{net_forward.1} parent=0 // pred_fallthru
    _
  // Predicated region
  $region30: #{net_forward.1} parent=0 // pred_check
    _
  $region31: #{net_forward.1} parent=0 // pred_check_branch
    %29 = sbr.rel (0) target = $region33
  $region32: #{net_forward.1} parent=0 // pred_region
    _
  $region33: #{net_forward.1} parent=0 // pred_fallthru
    _
  // Predicated region
  $region34: #{net_forward.1} parent=0 // pred_check
    _
  $region35: #{net_forward.1} parent=0 // pred_check_branch
    %31 = sbr.rel (0) target = $region37
  $region36: #{net_forward.1} parent=0 // pred_region
    _
  $region37: #{net_forward.1} parent=0 // pred_fallthru
    _
  %v32 = vld [vmem:[%s5] sm:$0xff]
  %v33 = vld [vmem:[%s5 + $0x8] sm:$0xff]
  %v34 = vld [vmem:[%s5 + $0x10] sm:$0xff]
  %v35 = vld [vmem:[%s5 + $0x18] sm:$0xff]
  %v36 = vld [vmem:[%s5 + $0x20] sm:$0xff]
  %v37 = vld [vmem:[%s6] sm:$0xff]
  %v38 = vld [vmem:[%s6 + $0x8] sm:$0xff]
  %v39 = vld [vmem:[%s6 + $0x10] sm:$0xff]
  %v40 = vld [vmem:[%s6 + $0x18] sm:$0xff]
  %v41 = vld [vmem:[%s6 + $0x20] sm:$0xff]
  %v42 = vld [vmem:[%s7] sm:$0xff]
  %v43 = vld [vmem:[%s8] sm:$0xff]
  %v44 = vld [vmem:[%s8 + $0x8] sm:$0xff]
  %v45 = vld [vmem:[%s8 + $0x10] sm:$0xff]
  %v46 = vld [vmem:[%s8 + $0x18] sm:$0xff]
  %v47 = vld [vmem:[%s0] sm:$0xff]
  %v48 = vld [vmem:[%s0 + $0x8] sm:$0xff]
  %v49 = vld [vmem:[%s0 + $0x10] sm:$0xff]
  %v50 = vld [vmem:[%s0 + $0x18] sm:$0xff]
  %vm51 = vcmp.gt.f32.partialorder %v47, 0.0
  %vm52 = vcmp.gt.f32.partialorder %v48, 0.0
  %vm53 = vcmp.gt.f32.partialorder %v49, 0.0
  %vm54 = vcmp.gt.f32.partialorder %v50, 0.0
  %v55 = vsel %vm51, 1, 0
  %v56 = vsel %vm52, 1, 0
  %v57 = vsel %vm53, 1, 0
  %v58 = vsel %vm54, 1, 0
  %v59 = vcvt.s32.f32 %v55
  %v60 = vcvt.s32.f32 %v56
  %v61 = vcvt.s32.f32 %v57
  %v62 = vcvt.s32.f32 %v58
  %v63 = vmax.f32 %v47, 0.0
  %v64 = vmax.f32 %v48, 0.0
  %v65 = vmax.f32 %v49, 0.0
  %v66 = vmax.f32 %v50, 0.0
  %v67 = vld [vmem:[%s1] sm:$0xff]
  %v68 = vld [vmem:[%s1 + $0x8] sm:$0xff]
  %v69 = vld [vmem:[%s1 + $0x10] sm:$0xff]
  %v70 = vld [vmem:[%s1 + $0x18] sm:$0xff]
  %v71 = vld [vmem:[%s2] sm:$0xff]
  %v72 = vld [vmem:[%s2 + $0x8] sm:$0xff]
  %v73 = vld [vmem:[%s2 + $0x10] sm:$0xff]
  %v74 = vld [vmem:[%s2 + $0x18] sm:$0xff]
  %76 = vset.pattern.permute.xlu0 0
  %77 = vperm.xlu0 %76, %v71
  %v78 = vpop.permute.xlu0 %77
  %81 = vset.pattern.permute.xlu0 0
  %82 = vperm.xlu0 %81, %v72
  %v83 = vpop.permute.xlu0 %82
  %86 = vset.pattern.permute.xlu0 0
  %87 = vperm.xlu0 %86, %v73
  %v88 = vpop.permute.xlu0 %87
  %91 = vset.pattern.permute.xlu0 0
  %92 = vperm.xlu0 %91, %v74
  %v93 = vpop.permute.xlu0 %92
  %vm95 = vcmask 261120
  %v97 = vsel %vm95, %v67, 0
  %v100 = vsel %vm95, %v68, 0
  %v103 = vsel %vm95, %v69, 0
  %v106 = vsel %vm95, %v70, 0
  %108 = vmatpush.msra.mxu0 0.0
  %109 = vmatpush.msra.mxu0 0.0
  %110 = vmatpush.msra.mxu0 0.0
  %111 = vmatpush.msra.mxu0 0.0
  %112 = vmatpush.msra.mxu0 0.0
  %113 = vmatpush.msra.mxu0 0.0
  %114 = vmatpush.msra.mxu0 0.0
  %115 = vmatpush.msra.mxu0 0.0
  %116 = vmatpush.msra.mxu0 0.0
  %117 = vmatpush.msra.mxu0 0.0
  %118 = vmatpush.msra.mxu0 0.0
  %119 = vmatpush.msra.mxu0 0.0
  %120 = vmatpush.msra.mxu0 %v66
  %121 = vmatpush.msra.mxu0 %v65
  %122 = vmatpush.msra.mxu0 %v64
  %123 = vmatpush.msra.mxu0 %v63
  %124 = vmatmul.f32.gmra.mxu0 %v97
  %v125 = vpop.f32.mrf.mxu0
  %v126 = vadd.f32 %v78, %v125
  %127 = vmatmul.f32.gmra.mxu0 %v100
  %v128 = vpop.f32.mrf.mxu0
  %v129 = vadd.f32 %v83, %v128
  %130 = vmatmul.f32.gmra.mxu0 %v103
  %v131 = vpop.f32.mrf.mxu0
  %v132 = vadd.f32 %v88, %v131
  %133 = vmatmul.f32.gmra.mxu0 %v106
  %v134 = vpop.f32.mrf.mxu0
  %v135 = vadd.f32 %v93, %v134
  %136 = vdwg.mxu0
  %v137 = vmax.f32 %v126, 0.0
  %v138 = vmax.f32 %v129, 0.0
  %v139 = vmax.f32 %v132, 0.0
  %v140 = vmax.f32 %v135, 0.0
  %v141 = vld [vmem:[%s3] sm:$0xff]
  %v142 = vld [vmem:[%s3 + $0x8] sm:$0xff]
  %v143 = vld [vmem:[%s3 + $0x10] sm:$0xff]
  %v144 = vld [vmem:[%s3 + $0x18] sm:$0xff]
  %v145 = vld [vmem:[%s4] sm:$0xff]
  %v146 = vld [vmem:[%s4 + $0x8] sm:$0xff]
  %v147 = vld [vmem:[%s4 + $0x10] sm:$0xff]
  %v148 = vld [vmem:[%s4 + $0x18] sm:$0xff]
  %150 = vset.pattern.permute.xlu0 0
  %151 = vperm.xlu0 %150, %v145
  %v152 = vpop.permute.xlu0 %151
  %155 = vset.pattern.permute.xlu0 0
  %156 = vperm.xlu0 %155, %v146
  %v157 = vpop.permute.xlu0 %156
  %160 = vset.pattern.permute.xlu0 0
  %161 = vperm.xlu0 %160, %v147
  %v162 = vpop.permute.xlu0 %161
  %165 = vset.pattern.permute.xlu0 0
  %166 = vperm.xlu0 %165, %v148
  %v167 = vpop.permute.xlu0 %166
  %v170 = vsel %vm95, %v141, 0
  %v173 = vsel %vm95, %v142, 0
  %v176 = vsel %vm95, %v143, 0
  %v179 = vsel %vm95, %v144, 0
  %181 = vmatpush.msra.mxu0 0.0
  %182 = vmatpush.msra.mxu0 0.0
  %183 = vmatpush.msra.mxu0 0.0
  %184 = vmatpush.msra.mxu0 0.0
  %185 = vmatpush.msra.mxu0 0.0
  %186 = vmatpush.msra.mxu0 0.0
  %187 = vmatpush.msra.mxu0 0.0
  %188 = vmatpush.msra.mxu0 0.0
  %189 = vmatpush.msra.mxu0 0.0
  %190 = vmatpush.msra.mxu0 0.0
  %191 = vmatpush.msra.mxu0 0.0
  %192 = vmatpush.msra.mxu0 0.0
  %193 = vmatpush.msra.mxu0 %v140
  %194 = vmatpush.msra.mxu0 %v139
  %195 = vmatpush.msra.mxu0 %v138
  %196 = vmatpush.msra.mxu0 %v137
  %197 = vmatmul.f32.gmra.mxu0 %v170
  %v198 = vpop.f32.mrf.mxu0
  %v199 = vadd.f32 %v152, %v198
  %200 = vmatmul.f32.gmra.mxu0 %v173
  %v201 = vpop.f32.mrf.mxu0
  %v202 = vadd.f32 %v157, %v201
  %203 = vmatmul.f32.gmra.mxu0 %v176
  %v204 = vpop.f32.mrf.mxu0
  %v205 = vadd.f32 %v162, %v204
  %206 = vmatmul.f32.gmra.mxu0 %v179
  %v207 = vpop.f32.mrf.mxu0
  %v208 = vadd.f32 %v167, %v207
  %209 = vdwg.mxu0
  %v210 = vmax.f32 %v199, 0.0
  %v211 = vmax.f32 %v202, 0.0
  %v212 = vmax.f32 %v205, 0.0
  %v213 = vmax.f32 %v208, 0.0
  %215 = vset.pattern.permute.xlu0 0
  %216 = vperm.xlu0 %215, %v37
  %v217 = vpop.permute.xlu0 %216
  %220 = vset.pattern.permute.xlu0 0
  %221 = vperm.xlu0 %220, %v38
  %v222 = vpop.permute.xlu0 %221
  %225 = vset.pattern.permute.xlu0 0
  %226 = vperm.xlu0 %225, %v39
  %v227 = vpop.permute.xlu0 %226
  %230 = vset.pattern.permute.xlu0 0
  %231 = vperm.xlu0 %230, %v40
  %v232 = vpop.permute.xlu0 %231
  %235 = vset.pattern.permute.xlu0 0
  %236 = vperm.xlu0 %235, %v41
  %v237 = vpop.permute.xlu0 %236
  %v240 = vsel %vm95, %v32, 0
  %v243 = vsel %vm95, %v33, 0
  %v246 = vsel %vm95, %v34, 0
  %v249 = vsel %vm95, %v35, 0
  %v252 = vsel %vm95, %v36, 0
  %254 = vmatpush.msra.mxu0 0.0
  %255 = vmatpush.msra.mxu0 0.0
  %256 = vmatpush.msra.mxu0 0.0
  %257 = vmatpush.msra.mxu0 0.0
  %258 = vmatpush.msra.mxu0 0.0
  %259 = vmatpush.msra.mxu0 0.0
  %260 = vmatpush.msra.mxu0 0.0
  %261 = vmatpush.msra.mxu0 0.0
  %262 = vmatpush.msra.mxu0 0.0
  %263 = vmatpush.msra.mxu0 0.0
  %264 = vmatpush.msra.mxu0 0.0
  %265 = vmatpush.msra.mxu0 0.0
  %266 = vmatpush.msra.mxu0 %v213
  %267 = vmatpush.msra.mxu0 %v212
  %268 = vmatpush.msra.mxu0 %v211
  %269 = vmatpush.msra.mxu0 %v210
  %270 = vmatmul.f32.gmra.mxu0 %v240
  %v271 = vpop.f32.mrf.mxu0
  %v272 = vadd.f32 %v217, %v271
  %273 = vmatmul.f32.gmra.mxu0 %v243
  %v274 = vpop.f32.mrf.mxu0
  %v275 = vadd.f32 %v222, %v274
  %276 = vmatmul.f32.gmra.mxu0 %v246
  %v277 = vpop.f32.mrf.mxu0
  %v278 = vadd.f32 %v227, %v277
  %279 = vmatmul.f32.gmra.mxu0 %v249
  %v280 = vpop.f32.mrf.mxu0
  %v281 = vadd.f32 %v232, %v280
  %282 = vmatmul.f32.gmra.mxu0 %v252
  %v283 = vpop.f32.mrf.mxu0
  %v284 = vadd.f32 %v237, %v283
  %285 = vdwg.mxu0
  %v286 = vmax.f32 %v272, 0.0
  %v287 = vmax.f32 %v275, 0.0
  %v288 = vmax.f32 %v278, 0.0
  %v289 = vmax.f32 %v281, 0.0
  %v290 = vmax.f32 %v284, 0.0
  %vm291 = vcmp.ne.f32.partialorder %v272, %v272
  %vm292 = vcmp.ne.f32.partialorder %v275, %v275
  %vm293 = vcmp.ne.f32.partialorder %v278, %v278
  %vm294 = vcmp.ne.f32.partialorder %v281, %v281
  %vm295 = vcmp.ne.f32.partialorder %v284, %v284
  %v296 = vadd.f32 %v272, 0.0
  %v297 = vadd.f32 %v275, 0.0
  %v298 = vadd.f32 %v278, 0.0
  %v299 = vadd.f32 %v281, 0.0
  %v300 = vadd.f32 %v284, 0.0
  %v301 = vand.u32 2147483647, %v272
  %v302 = vand.u32 2147483647, %v275
  %v303 = vand.u32 2147483647, %v278
  %v304 = vand.u32 2147483647, %v281
  %v305 = vand.u32 2147483647, %v284
  %v306 = vsub.f32 0.0, %v301
  %v307 = vsub.f32 0.0, %v302
  %v308 = vsub.f32 0.0, %v303
  %v309 = vsub.f32 0.0, %v304
  %v310 = vsub.f32 0.0, %v305
  %v311 = vmul.f32 %v306, 1.442695
  %v312 = vpow.pop %v311
  %v313 = vmul.f32 %v307, 1.442695
  %v314 = vpow.pop %v313
  %v315 = vmul.f32 %v308, 1.442695
  %v316 = vpow.pop %v315
  %v317 = vmul.f32 %v309, 1.442695
  %v318 = vpow.pop %v317
  %v319 = vmul.f32 %v310, 1.442695
  %v320 = vpow.pop %v319
  %v321 = vadd.f32 %v312, 1.0
  %v322 = vlog2.pop %v321
  %v323 = vmul.f32 %v322, 0.6931472
  %v324 = vmul.f32 -0.5, %v312
  %v325 = vadd.f32 %v324, 1.0
  %v326 = vmul.f32 %v325, %v312
  %v327 = vand.u32 2147483647, %v312
  %vm328 = vcmp.lt.f32.partialorder %v327, 0.0004427343
  %v329 = vsel %vm328, %v326, %v323
  %v330 = vadd.f32 %v314, 1.0
  %v331 = vlog2.pop %v330
  %v332 = vmul.f32 %v331, 0.6931472
  %v333 = vmul.f32 -0.5, %v314
  %v334 = vadd.f32 %v333, 1.0
  %v335 = vmul.f32 %v334, %v314
  %v336 = vand.u32 2147483647, %v314
  %vm337 = vcmp.lt.f32.partialorder %v336, 0.0004427343
  %v338 = vsel %vm337, %v335, %v332
  %v339 = vadd.f32 %v316, 1.0
  %v340 = vlog2.pop %v339
  %v341 = vmul.f32 %v340, 0.6931472
  %v342 = vmul.f32 -0.5, %v316
  %v343 = vadd.f32 %v342, 1.0
  %v344 = vmul.f32 %v343, %v316
  %v345 = vand.u32 2147483647, %v316
  %vm346 = vcmp.lt.f32.partialorder %v345, 0.0004427343
  %v347 = vsel %vm346, %v344, %v341
  %v348 = vadd.f32 %v318, 1.0
  %v349 = vlog2.pop %v348
  %v350 = vmul.f32 %v349, 0.6931472
  %v351 = vmul.f32 -0.5, %v318
  %v352 = vadd.f32 %v351, 1.0
  %v353 = vmul.f32 %v352, %v318
  %v354 = vand.u32 2147483647, %v318
  %vm355 = vcmp.lt.f32.partialorder %v354, 0.0004427343
  %v356 = vsel %vm355, %v353, %v350
  %v357 = vadd.f32 %v320, 1.0
  %v358 = vlog2.pop %v357
  %v359 = vmul.f32 %v358, 0.6931472
  %v360 = vmul.f32 -0.5, %v320
  %v361 = vadd.f32 %v360, 1.0
  %v362 = vmul.f32 %v361, %v320
  %v363 = vand.u32 2147483647, %v320
  %vm364 = vcmp.lt.f32.partialorder %v363, 0.0004427343
  %v365 = vsel %vm364, %v362, %v359
  %v366 = vadd.f32 %v286, %v329
  %v367 = vadd.f32 %v287, %v338
  %v368 = vadd.f32 %v288, %v347
  %v369 = vadd.f32 %v289, %v356
  %v370 = vadd.f32 %v290, %v365
  %v371 = vsel %vm291, %v296, %v366
  %v372 = vsel %vm292, %v297, %v367
  %v373 = vsel %vm293, %v298, %v368
  %v374 = vsel %vm294, %v299, %v369
  %v375 = vsel %vm295, %v300, %v370
  %v376 = vmul.f32 %v371, %v59
  %v377 = vmul.f32 %v372, %v60
  %v378 = vmul.f32 %v373, %v61
  %v379 = vmul.f32 %v374, %v62
  %v381 = vsel %vm95, %v42, 0
  %383 = vmatpush.msra.mxu0 0.0
  %384 = vmatpush.msra.mxu0 0.0
  %385 = vmatpush.msra.mxu0 0.0
  %386 = vmatpush.msra.mxu0 0.0
  %387 = vmatpush.msra.mxu0 0.0
  %388 = vmatpush.msra.mxu0 0.0
  %389 = vmatpush.msra.mxu0 0.0
  %390 = vmatpush.msra.mxu0 0.0
  %391 = vmatpush.msra.mxu0 0.0
  %392 = vmatpush.msra.mxu0 0.0
  %393 = vmatpush.msra.mxu0 0.0
  %394 = vmatpush.msra.mxu0 0.0
  %395 = vmatpush.msra.mxu0 %v379
  %396 = vmatpush.msra.mxu0 %v378
  %397 = vmatpush.msra.mxu0 %v377
  %398 = vmatpush.msra.mxu0 %v376
  %399 = vmatmul.f32.gmra.mxu0 %v381
  %v400 = vpop.f32.mrf.mxu0
  %v401 = vadd.f32 %v375, %v400
  %402 = vdwg.mxu0
  %vm403 = vcmask 64512
  %v405 = vsel %vm403, %v43, 0
  %v408 = vsel %vm403, %v44, 0
  %v411 = vsel %vm403, %v45, 0
  %v414 = vsel %vm403, %v46, 0
  %416 = vmatpush.msra.mxu0 0.0
  %417 = vmatpush.msra.mxu0 0.0
  %418 = vmatpush.msra.mxu0 0.0
  %419 = vmatpush.msra.mxu0 0.0
  %420 = vmatpush.msra.mxu0 0.0
  %421 = vmatpush.msra.mxu0 0.0
  %422 = vmatpush.msra.mxu0 0.0
  %423 = vmatpush.msra.mxu0 0.0
  %424 = vmatpush.msra.mxu0 0.0
  %425 = vmatpush.msra.mxu0 0.0
  %426 = vmatpush.msra.mxu0 0.0
  %427 = vmatpush.msra.mxu0 0.0
  %428 = vmatpush.msra.mxu0 0.0
  %429 = vmatpush.msra.mxu0 0.0
  %430 = vmatpush.msra.mxu0 0.0
  %431 = vmatpush.msra.mxu0 %v401
  %432 = vmatmul.f32.gmra.mxu0 %v405
  %v433 = vpop.f32.mrf.mxu0
  %v434 = vadd.f32 0.0, %v433
  %435 = vmatmul.f32.gmra.mxu0 %v408
  %v436 = vpop.f32.mrf.mxu0
  %v437 = vadd.f32 0.0, %v436
  %438 = vmatmul.f32.gmra.mxu0 %v411
  %v439 = vpop.f32.mrf.mxu0
  %v440 = vadd.f32 0.0, %v439
  %441 = vmatmul.f32.gmra.mxu0 %v414
  %v442 = vpop.f32.mrf.mxu0
  %v443 = vadd.f32 0.0, %v442
  %444 = vdwg.mxu0
  %v445 = vmax.f32 %v434, 1e-08
  %v446 = vmax.f32 %v437, 1e-08
  %v447 = vmax.f32 %v440, 1e-08
  %v448 = vmax.f32 %v443, 1e-08
  %v449 = vrcp.pop %v445
  %v450 = vrcp.pop %v446
  %v451 = vrcp.pop %v447
  %v452 = vrcp.pop %v448
  %v453 = vmul.f32 %v376, %v449
  %v454 = vmul.f32 %v377, %v450
  %v455 = vmul.f32 %v378, %v451
  %v456 = vmul.f32 %v379, %v452
  %v457 = vmin.f32 %v453, %v455
  %v458 = vmin.f32 %v454, %v456
  %459 = vst [vmem:[%s9] sm:$0xff] %v457
  %460 = vst [vmem:[%s9 + $0x8] sm:$0xff] %v458
  // Predicated region
  $region38: #{net_forward.1} parent=0 // pred_check
    _
  $region39: #{net_forward.1} parent=0 // pred_check_branch
    %462 = sbr.rel (0) target = $region41
  $region40: #{net_forward.1} parent=0 // pred_region
    _
  $region41: #{net_forward.1} parent=0 // pred_fallthru
    _
  // Predicated region
  $region42: #{net_forward.1} parent=0 // pred_check
    _
  $region43: #{net_forward.1} parent=0 // pred_check_branch
    %464 = sbr.rel (0) target = $region45
  $region44: #{net_forward.1} parent=0 // pred_region
    _
  $region45: #{net_forward.1} parent=0 // pred_fallthru
    _

</llo_original>
